<compile_context>
chip_gen: v7x
topology: tpu7x:2x2x1
jax: 0.10.0
libtpu: 0.0.40
codegen_flags: <defaults>
</compile_context>

<pallas_src>
import jax
import jax.numpy as jnp
from jax.experimental import pallas as pl
from jax.experimental.pallas import tpu as pltpu

LANE = 128
TARGET_BLOCK_ROWS = 2048      # (2048, 128) int32/f32 block = 1 MiB per array
PALLAS_MIN_BATCH = 4096       # below this a fused XLA gather is strictly faster


def _round_up(x, m):
    return ((x + m - 1) // m) * m


def net_kernel(tab_ref, comb_ref, out_ref):
    # tab_ref : SMEM (V,) f32               -- folded relu(embed)@W (+bias) per (s,a) pair
    # comb_ref: VMEM (block_rows, 128) int32 -- combined index s*action_n + a
    # out_ref : VMEM (block_rows, 128) f32
    comb = comb_ref[...]
    V = tab_ref.shape[0]
    q = jnp.full(comb.shape, tab_ref[V - 1], jnp.float32)
    # Static, tiny vocab (default 2*2 = 4): unrolled VPU selects, zero MXU traffic.
    # TODO(synk): for large ob_n*action_n switch to a DMA / one-hot gather path instead.
    for v in range(V - 2, -1, -1):
        q = jnp.where(comb == v, tab_ref[v], q)
    out_ref[...] = q


def _fold_tables(params):
    """Fold relu + concat + Linear(32,1) + bias into one (ob_n*action_n,) f32 table."""
    state_tab, action_tab, w_out, b_out = params
    w = w_out.reshape(32)
    qs = jnp.maximum(state_tab, 0.0) @ w[:16] + b_out.reshape(())   # (ob_n,)
    qa = jnp.maximum(action_tab, 0.0) @ w[16:]                      # (action_n,)
    return (qs[:, None] + qa[None, :]).reshape(-1).astype(jnp.float32)


def net_forward(s, a, params, *, force_pallas=False):
    """s, a: integer index arrays with B elements each. Returns q of shape (B,) f32."""
    state_tab, action_tab, w_out, b_out = params
    action_n = action_tab.shape[0]

    # torch.squeeze(s) + elementwise embedding lookup -> flatten indices to 1-D.
    s_flat = jnp.asarray(s, jnp.int32).reshape(-1)
    a_flat = jnp.asarray(a, jnp.int32).reshape(-1)
    assert s_flat.shape == a_flat.shape
    B = s_flat.shape[0]

    comb_tab = _fold_tables(params)            # (ob_n*action_n,)
    combined = s_flat * action_n + a_flat      # single 4 B/elem index stream

    if B < PALLAS_MIN_BATCH and not force_pallas:
        # Small-batch fallback: a fused XLA gather beats kernel-launch + pad overhead.
        return jnp.take(comb_tab, combined, axis=0)

    # 2-D sublane+lane-dense layout: (rows, 128) with (block_rows, 128) tiles.
    rows = max(1, pl.cdiv(B, LANE))
    if rows <= 8:
        block_rows = 8
    else:
        # At least 2 grid steps when possible (v7x has 2 TCs), capped at ~1 MiB blocks.
        block_rows = min(TARGET_BLOCK_ROWS, _round_up(pl.cdiv(rows, 2), 8))
    rows_pad = _round_up(rows, block_rows)
    total_pad = rows_pad * LANE

    if total_pad == B:
        comb_pad = combined                    # no extra pad pass over the inputs
    else:
        comb_pad = jnp.zeros((total_pad,), jnp.int32).at[:B].set(combined)
    comb_2d = comb_pad.reshape(rows_pad, LANE)

    smem_spec = pl.BlockSpec(memory_space=pltpu.MemorySpace.SMEM)
    tile_spec = pl.BlockSpec((block_rows, LANE), lambda i: (i, 0))

    q_pad = pl.pallas_call(
        net_kernel,
        out_shape=jax.ShapeDtypeStruct((rows_pad, LANE), jnp.float32),
        grid=(rows_pad // block_rows,),
        in_specs=[smem_spec, tile_spec],
        out_specs=tile_spec,
        compiler_params=pltpu.CompilerParams(
            dimension_semantics=("parallel",)),
    )(comb_tab, comb_2d)

    return q_pad.reshape(-1)[:B]


def init_params(key, action_n=2, ob_n=2):
    k1, k2, k3, k4 = jax.random.split(key, 4)
    # Embeddings ~ N(0, 1) like torch.nn.Embedding default.
    action_tab = jax.random.normal(k1, (action_n, 16), jnp.float32)
    state_tab = jax.random.normal(k2, (ob_n, 16), jnp.float32)
    # Linear(32, 1): uniform(-1/sqrt(32), 1/sqrt(32)) like torch default.
    bound = 1.0 / jnp.sqrt(32.0)
    w_out = jax.random.uniform(k3, (32, 1), jnp.float32, -bound, bound)
    b_out = jax.random.uniform(k4, (1, 1), jnp.float32, -bound, bound)
    # self.fc (Linear(32,32)) exists in __init__ but is unused in forward -> not materialized.
    return state_tab, action_tab, w_out, b_out


if __name__ == "__main__":
    key = jax.random.PRNGKey(0)
    kp, ks1, ka1, ks2, ka2 = jax.random.split(key, 5)

    action_n, ob_n = 2, 2
    params = init_params(kp, action_n=action_n, ob_n=ob_n)
    state_tab, action_tab, w_out, b_out = params

    def reference(s, a):
        # Pure-JAX reference of the ORIGINAL (unfolded) forward path.
        s_e = jnp.maximum(state_tab[jnp.asarray(s).reshape(-1)], 0.0)
        a_e = jnp.maximum(action_tab[jnp.asarray(a).reshape(-1)], 0.0)
        sa = jnp.concatenate([s_e, a_e], axis=-1)
        return jnp.squeeze(sa @ w_out + b_out[0, 0], axis=-1)

    # 1) Small batch forced through the Pallas path (single (8,128) block).
    B1 = 8
    s1 = jax.random.randint(ks1, (B1, 1), 0, ob_n, jnp.int32)   # (B,1) -> squeezed inside
    a1 = jax.random.randint(ka1, (B1,), 0, action_n, jnp.int32)
    q1 = jax.block_until_ready(net_forward(s1, a1, params, force_pallas=True))
    assert q1.shape == (B1,)
    assert jnp.allclose(q1, reference(s1, a1), atol=1e-5, rtol=1e-5)

    # 2) Larger batch exercising padding + a 2-step "parallel" grid.
    B2 = 3000
    s2 = jax.random.randint(ks2, (B2,), 0, ob_n, jnp.int32)
    a2 = jax.random.randint(ka2, (B2,), 0, action_n, jnp.int32)
    q2 = jax.block_until_ready(net_forward(s2, a2, params, force_pallas=True))
    assert q2.shape == (B2,)
    assert jnp.allclose(q2, reference(s2, a2), atol=1e-5, rtol=1e-5)

    # 3) Default dispatch for tiny batches uses the fused XLA gather fallback.
    q3 = jax.block_until_ready(net_forward(s1, a1, params))
    assert jnp.allclose(q3, q1, atol=1e-6, rtol=1e-6)

    print("KERNEL_OK")
</pallas_src>

<mosaic_0001>
module attributes {stable_mosaic.version = 11 : i64} {
  func.func @net_kernel(%arg0: i32, %arg1: memref<4xf32, #tpu.memory_space<smem>>, %arg2: memref<8x128xi32, #tpu.memory_space<vmem>>, %arg3: memref<8x128xf32, #tpu.memory_space<vmem>>) attributes {dimension_semantics = [#tpu.dimension_semantics<parallel>], iteration_bounds = array<i64: 1>, scalar_prefetch = 0 : i64, scratch_operands = 0 : i64, tpu.core_type = #tpu.core_type<tc>, window_params = [{transform_indices = @transform_0, window_bounds = array<i64: 4>}, {transform_indices = @transform_1, window_bounds = array<i64: 8, 128>}, {transform_indices = @transform_2, window_bounds = array<i64: 8, 128>}]} {
    %c0 = arith.constant 0 : index
    %c0_0 = arith.constant 0 : index
    %0 = vector.load %arg2[%c0, %c0_0] : memref<8x128xi32, #tpu.memory_space<vmem>>, vector<8x128xi32>
    %c3 = arith.constant 3 : index
    %1 = memref.load %arg1[%c3] : memref<4xf32, #tpu.memory_space<smem>>
    %2 = vector.broadcast %1 : f32 to vector<8x128xf32>
    %c2_i32 = arith.constant 2 : i32
    %3 = vector.broadcast %c2_i32 : i32 to vector<8x128xi32>
    %4 = arith.cmpi eq, %0, %3 : vector<8x128xi32>
    %c2 = arith.constant 2 : index
    %5 = memref.load %arg1[%c2] : memref<4xf32, #tpu.memory_space<smem>>
    %6 = vector.broadcast %5 : f32 to vector<8x128xf32>
    %7 = arith.select %4, %6, %2 : vector<8x128xi1>, vector<8x128xf32>
    %c1_i32 = arith.constant 1 : i32
    %8 = vector.broadcast %c1_i32 : i32 to vector<8x128xi32>
    %9 = arith.cmpi eq, %0, %8 : vector<8x128xi32>
    %c1 = arith.constant 1 : index
    %10 = memref.load %arg1[%c1] : memref<4xf32, #tpu.memory_space<smem>>
    %11 = vector.broadcast %10 : f32 to vector<8x128xf32>
    %12 = arith.select %9, %11, %7 : vector<8x128xi1>, vector<8x128xf32>
    %c0_i32 = arith.constant 0 : i32
    %13 = vector.broadcast %c0_i32 : i32 to vector<8x128xi32>
    %14 = arith.cmpi eq, %0, %13 : vector<8x128xi32>
    %c0_1 = arith.constant 0 : index
    %15 = memref.load %arg1[%c0_1] : memref<4xf32, #tpu.memory_space<smem>>
    %16 = vector.broadcast %15 : f32 to vector<8x128xf32>
    %17 = arith.select %14, %16, %12 : vector<8x128xi1>, vector<8x128xf32>
    %c0_2 = arith.constant 0 : index
    %c0_3 = arith.constant 0 : index
    %18 = vector.load %arg3[%c0_2, %c0_3] : memref<8x128xf32, #tpu.memory_space<vmem>>, vector<8x128xf32>
    tpu.vector_store %arg3[%c0_2, %c0_3], %17 {strides = array<i32>} : memref<8x128xf32, #tpu.memory_space<vmem>>, vector<8x128xf32>,
    return
  }
  func.func @transform_0(%arg0: i32) -> i32 {
    %c0_i32 = arith.constant 0 : i32
    %c0_i32_0 = arith.constant 0 : i32
    return %c0_i32 : i32
  }
  func.func @transform_1(%arg0: i32) -> (i32, i32) {
    %c0_i32 = arith.constant 0 : i32
    %c0_i32_0 = arith.constant 0 : i32
    return %arg0, %c0_i32 : i32, i32
  }
  func.func @transform_2(%arg0: i32) -> (i32, i32) {
    %c0_i32 = arith.constant 0 : i32
    %c0_i32_0 = arith.constant 0 : i32
    return %arg0, %c0_i32 : i32, i32
  }
}

</mosaic_0001>

<llo_original>
// kernel: tpu_custom_call.1
$region0: #{tpu_custom_call.1}
  #allocation0 [shape = 'u32[]', space=smem, size = 0x4, offset = 0x4, fixed_abs, tag = 'smem constant byte address 0x4 - core index']
  #allocation1 [shape = 'u32[144,128]{1,0:T(1,128)}', space=vmem, size = 0x12000, scoped, tag = 'internal scratch']
  %s0 = inlined_call_operand.hbm [shape: f32[4], index: 0, kind: input, shape index: {}]
  %s1 = inlined_call_operand.hbm [shape: s32[8,128], index: 1, kind: input, shape index: {}]
  %s2 = inlined_call_operand.hbm [shape: f32[8,128], index: 2, kind: output, shape index: {}]
  %s3 = sld [smem:[#allocation0]]
  $region26: #{tpu_custom_call.1} parent=0
    _
  %s5 = ssub.s32 1, %s3
  %s6 = scalar_select 0, %s5, %s3
  $region1: #{tpu_custom_call.1} parent=0
    #allocation2 [shape = 'u8[512]{0}', space=smem, size = 0x200, scoped, tag = 'input window, operand 0, single buffered']
    #allocation3 [shape = 's32[1]{0}', space=sflag, size = 0x4, scoped, tag = 'scoped memory for tpu_custom_call.1']
    #allocation4 [shape = 's32[1]{0}', space=sflag, size = 0x4, scoped, tag = 'scoped memory for tpu_custom_call.1']
    #allocation5 [shape = 's32[1]{0}', space=sflag, size = 0x4, scoped, tag = 'scoped memory for tpu_custom_call.1']
    #allocation6 [shape = 'u8[4096]{0}', space=vmem, size = 0x1000, scoped, tag = 'input window, operand 1, single buffered']
    #allocation7 [shape = 'u8[4096]{0}', space=vmem, size = 0x1000, scoped, tag = 'output window, operand 0, single buffered']
    %7 = vsyncpa [#allocation5], 0
    %8 = vsyncpa [#allocation3], 0
    %9 = vsyncpa [#allocation4], 0
    // Predicated region
    $region2: #{tpu_custom_call.1} parent=1 // pred_check
      _
    $region3: #{tpu_custom_call.1} parent=1 // pred_check_branch
      %11 = sbr.rel (0) target = $region5
    $region4: #{tpu_custom_call.1} parent=1 // pred_region
      %s13 = ssub.s32 16, 16
      %14 = vsyncadd [#allocation5], %s13
      %17 = dma.hbm_to_smem %s0, 16, [#allocation2], [#allocation5]
    $region5: #{tpu_custom_call.1} parent=1 // pred_fallthru
      _
    // Predicated region
    $region6: #{tpu_custom_call.1} parent=1 // pred_check
      _
    $region7: #{tpu_custom_call.1} parent=1 // pred_check_branch
      %19 = sbr.rel (0) target = $region9
    $region8: #{tpu_custom_call.1} parent=1 // pred_region
      %s21 = ssub.s32 128, 128
      %22 = vsyncadd [#allocation3], %s21
      %s24 = sshll.u32 [#allocation6], 4
      %s25 = int_to_ptr.vmem [resolvable:$true] %s24
      %27 = dma.hbm_to_vmem [thread:$0]  %s1, 128, %s25, [#allocation3]
    $region9: #{tpu_custom_call.1} parent=1 // pred_fallthru
      _
    // Predicated region
    $region10: #{tpu_custom_call.1} parent=1 // pred_check
      _
    $region11: #{tpu_custom_call.1} parent=1 // pred_check_branch
      %29 = sbr.rel (0) target = $region13
    $region12: #{tpu_custom_call.1} parent=1 // pred_region
      %30 = dma.done [#allocation5], 16
    $region13: #{tpu_custom_call.1} parent=1 // pred_fallthru
      _
    // Predicated region
    $region14: #{tpu_custom_call.1} parent=1 // pred_check
      _
    $region15: #{tpu_custom_call.1} parent=1 // pred_check_branch
      %32 = sbr.rel (0) target = $region17
    $region16: #{tpu_custom_call.1} parent=1 // pred_region
      %33 = dma.done [#allocation3], 128
    $region17: #{tpu_custom_call.1} parent=1 // pred_fallthru
      _
    %34 = sfence
    %v35 = vld [vmem:[#allocation6] sm:$0xff]
    %s36 = sld [smem:[#allocation2 + $0x3]]
    %v37 = vstv %s36
    %vm38 = vcmp.eq.s32.totalorder %v35, 2
    %s39 = sld [smem:[#allocation2 + $0x2]]
    %v40 = vstv %s39
    %v41 = vsel %vm38, %v40, %v37
    %vm42 = vcmp.eq.s32.totalorder %v35, 1
    %s43 = sld [smem:[#allocation2 + $0x1]]
    %v44 = vstv %s43
    %v45 = vsel %vm42, %v44, %v41
    %vm46 = vcmp.eq.s32.totalorder %v35, 0
    %s47 = sld [smem:[#allocation2]]
    %v48 = vstv %s47
    %v49 = vsel %vm46, %v48, %v45
    %50 = vst [vmem:[#allocation7] sm:$0xff] %v49
    // Predicated region
    $region18: #{tpu_custom_call.1} parent=1 // pred_check
      _
    $region19: #{tpu_custom_call.1} parent=1 // pred_check_branch
      %52 = sbr.rel (0) target = $region21
    $region20: #{tpu_custom_call.1} parent=1 // pred_region
      %s54 = ssub.s32 128, 128
      %55 = vsyncadd [#allocation4], %s54
      %s57 = sshll.u32 [#allocation7], 4
      %s58 = int_to_ptr.vmem [resolvable:$true] %s57
      %60 = dma.vmem_to_hbm [thread:$0]  %s58, 128, %s2, [#allocation4]
    $region21: #{tpu_custom_call.1} parent=1 // pred_fallthru
      _
    // Predicated region
    $region22: #{tpu_custom_call.1} parent=1 // pred_check
      _
    $region23: #{tpu_custom_call.1} parent=1 // pred_check_branch
      %62 = sbr.rel (0) target = $region25
    $region24: #{tpu_custom_call.1} parent=1 // pred_region
      %63 = dma.done [#allocation4], 128
    $region25: #{tpu_custom_call.1} parent=1 // pred_fallthru
      _
    %64 = vsyncpa [#allocation3], 1
    %65 = vsyncpa [#allocation4], 1
    %66 = vsyncpa [#allocation5], 1

</llo_original>
